<compile_context>
chip_gen: v6e
topology: v6e:2x2x1
jax: 0.10.0
libtpu: 0.0.40
codegen_flags: <defaults>
</compile_context>

<pallas_src>
import functools

import jax
import jax.numpy as jnp
from jax.experimental import pallas as pl
from jax.experimental.pallas import tpu as pltpu


@functools.partial(jax.jit, static_argnames=())
def rnn_forward(x, h0, w_ih, w_hh, b_ih, b_hh, w_hy, b_hy):
    """x: (S, B, D) f32; h0: (1, B, H); returns log-probs (B, C)."""
    S, B, D = x.shape
    H = w_ih.shape[0]
    C = w_hy.shape[0]

    Bp = ((B + 7) // 8) * 8                  # batch padded to 8 sublanes
    pad_b = Bp - B
    Cp = 128                                 # class axis padded to a full lane dim
    NEG = jnp.float32(-1e30)                 # masks padded class columns pre-LSE

    # ---- jitted (fusing) wrapper prep ------------------------------------
    x_flat = jnp.pad(x, ((0, 0), (0, pad_b), (0, 0))).reshape(S * Bp, D)

    # Pack 1 (lane width = H): [W_ih^T ; W_hh^T ; h0 ; combined RNN bias].
    pack_h = jnp.concatenate([
        w_ih.T,                                                    # rows [0, D)
        w_hh.T,                                                    # rows [D, D+H)
        jnp.pad(h0.reshape(B, H), ((0, pad_b), (0, 0))),           # rows [D+H, D+H+Bp)
        jnp.broadcast_to(b_ih + b_hh, (8, H)),                     # rows [D+H+Bp, +8)
    ], axis=0).astype(jnp.float32)

    # Pack 2 (lane width = Cp): [W_hy^T padded ; b_hy padded with -1e30].
    bhy_row = jnp.full((Cp,), NEG, jnp.float32).at[:C].set(b_hy)
    pack_c = jnp.concatenate([
        jnp.pad(w_hy.T, ((0, 0), (0, Cp - C))),                    # rows [0, H)
        jnp.broadcast_to(bhy_row, (8, Cp)),                        # rows [H, H+8)
    ], axis=0).astype(jnp.float32)

    def kernel(x_ref, ph_ref, pc_ref, out_ref):
        wih = ph_ref[0:D, :]                            # (D, H)
        whh = ph_ref[D:D + H, :]                        # (H, H)
        h = ph_ref[D + H:D + H + Bp, :]                 # (Bp, H)  carried state
        b = ph_ref[D + H + Bp:D + H + Bp + 1, :]        # (1, H)   combined bias

        # Hoisted input projection: one batched MXU GEMM, off the serial chain.
        xproj = jnp.dot(x_ref[...], wih,
                        preferred_element_type=jnp.float32) + b    # (S*Bp, H)

        # Fully unrolled tanh recurrence: one MXU push + one EUP tanh / step.
        for t in range(S):                               # S static -> unrolled
            pre = xproj[t * Bp:(t + 1) * Bp, :] + jnp.dot(
                h, whh, preferred_element_type=jnp.float32)
            h = jnp.tanh(pre)

        # Head + log-softmax on the full (Bp, Cp) tile; padded class columns
        # carry -1e30 bias so exp()==0 and the LSE only sees real classes.
        why = pc_ref[0:H, :]                             # (H, Cp)
        bhy = pc_ref[H:H + 1, :]                         # (1, Cp)
        logits = jnp.dot(h, why,
                         preferred_element_type=jnp.float32) + bhy  # (Bp, Cp)
        m = jnp.max(logits, axis=1, keepdims=True)
        lse = jnp.log(jnp.sum(jnp.exp(logits - m), axis=1, keepdims=True)) + m
        out_ref[...] = (logits - lse).astype(out_ref.dtype)         # full-tile store

    vmem = lambda: pl.BlockSpec(memory_space=pltpu.MemorySpace.VMEM)
    out_full = pl.pallas_call(
        kernel,
        out_shape=jax.ShapeDtypeStruct((Bp, Cp), jnp.float32),
        in_specs=[vmem(), vmem(), vmem()],
        out_specs=vmem(),
        compiler_params=pltpu.CompilerParams(vmem_limit_bytes=32 * 1024 * 1024),
    )(x_flat, pack_h, pack_c)

    # Real rows / classes only; fuses with the surrounding jit.
    return out_full[:B, :C]


def rnn_reference(x, h0, w_ih, w_hh, b_ih, b_hh, w_hy, b_hy):
    """Plain-JAX reference mirroring the PyTorch forward."""
    h = h0[0]
    for t in range(x.shape[0]):
        h = jnp.tanh(x[t] @ w_ih.T + b_ih + h @ w_hh.T + b_hh)
    out = h @ w_hy.T + b_hy          # (B, 2); sum over the layer dim is identity
    return jax.nn.log_softmax(out, axis=1)


if __name__ == "__main__":
    SEQ, BATCH, INPUT_DIM, HIDDEN, CLASSES = 8, 2, 16, 32, 2

    key = jax.random.PRNGKey(0)
    ks = jax.random.split(key, 8)
    scale = 1.0 / jnp.sqrt(HIDDEN)

    x = jax.random.normal(ks[0], (SEQ, BATCH, INPUT_DIM), jnp.float32)
    h0 = jnp.zeros((1, BATCH, HIDDEN), jnp.float32)

    # Deterministic parameter init (uniform, matching PyTorch param shapes).
    w_ih = jax.random.uniform(ks[1], (HIDDEN, INPUT_DIM), jnp.float32, -scale, scale)
    w_hh = jax.random.uniform(ks[2], (HIDDEN, HIDDEN), jnp.float32, -scale, scale)
    b_ih = jax.random.uniform(ks[3], (HIDDEN,), jnp.float32, -scale, scale)
    b_hh = jax.random.uniform(ks[4], (HIDDEN,), jnp.float32, -scale, scale)
    w_hy = jax.random.uniform(ks[5], (CLASSES, HIDDEN), jnp.float32, -scale, scale)
    b_hy = jax.random.uniform(ks[6], (CLASSES,), jnp.float32, -scale, scale)

    out = jax.block_until_ready(
        rnn_forward(x, h0, w_ih, w_hh, b_ih, b_hh, w_hy, b_hy))

    ref = rnn_reference(x, h0, w_ih, w_hh, b_ih, b_hh, w_hy, b_hy)
    assert out.shape == (BATCH, CLASSES)
    assert jnp.allclose(out, ref, atol=1e-4, rtol=1e-4)

    print("KERNEL_OK")
</pallas_src>

<mosaic_0001>
module attributes {stable_mosaic.version = 11 : i64} {
  func.func @kernel(%arg0: memref<64x16xf32, #tpu.memory_space<vmem>>, %arg1: memref<64x32xf32, #tpu.memory_space<vmem>>, %arg2: memref<40x128xf32, #tpu.memory_space<vmem>>, %arg3: memref<8x128xf32, #tpu.memory_space<vmem>>) attributes {dimension_semantics = [], scalar_prefetch = 0 : i64, scratch_operands = 0 : i64, tpu.core_type = #tpu.core_type<tc>} {
    %c0 = arith.constant 0 : index
    %c0_0 = arith.constant 0 : index
    %0 = vector.load %arg1[%c0, %c0_0] : memref<64x32xf32, #tpu.memory_space<vmem>>, vector<16x32xf32>
    %c16 = arith.constant 16 : index
    %c0_1 = arith.constant 0 : index
    %1 = vector.load %arg1[%c16, %c0_1] : memref<64x32xf32, #tpu.memory_space<vmem>>, vector<32x32xf32>
    %c48 = arith.constant 48 : index
    %c0_2 = arith.constant 0 : index
    %2 = vector.load %arg1[%c48, %c0_2] : memref<64x32xf32, #tpu.memory_space<vmem>>, vector<8x32xf32>
    %c56 = arith.constant 56 : index
    %c0_3 = arith.constant 0 : index
    %3 = vector.load %arg1[%c56, %c0_3] : memref<64x32xf32, #tpu.memory_space<vmem>>, vector<1x32xf32>
    %c0_4 = arith.constant 0 : index
    %c0_5 = arith.constant 0 : index
    %4 = vector.load %arg0[%c0_4, %c0_5] : memref<64x16xf32, #tpu.memory_space<vmem>>, vector<64x16xf32>
    %cst = arith.constant dense<0.000000e+00> : vector<64x32xf32>
    %5 = tpu.matmul %4, %0, %cst {dimension_numbers = #tpu.dot_dimension_numbers<[1], [0], [0], [1], [0, 0, 1, 1], [], []>} : vector<64x16xf32>, vector<16x32xf32>, vector<64x32xf32> -> vector<64x32xf32>
    %6 = vector.broadcast %3 : vector<1x32xf32> to vector<64x32xf32>
    %7 = arith.addf %5, %6 : vector<64x32xf32>
    %8 = vector.extract_strided_slice %7 {offsets = [0, 0], sizes = [8, 32], strides = [1, 1]} : vector<64x32xf32> to vector<8x32xf32>
    %cst_6 = arith.constant dense<0.000000e+00> : vector<8x32xf32>
    %9 = tpu.matmul %2, %1, %cst_6 {dimension_numbers = #tpu.dot_dimension_numbers<[1], [0], [0], [1], [0, 0, 1, 1], [], []>} : vector<8x32xf32>, vector<32x32xf32>, vector<8x32xf32> -> vector<8x32xf32>
    %10 = arith.addf %8, %9 : vector<8x32xf32>
    %11 = math.tanh %10 : vector<8x32xf32>
    %12 = vector.extract_strided_slice %7 {offsets = [8, 0], sizes = [8, 32], strides = [1, 1]} : vector<64x32xf32> to vector<8x32xf32>
    %cst_7 = arith.constant dense<0.000000e+00> : vector<8x32xf32>
    %13 = tpu.matmul %11, %1, %cst_7 {dimension_numbers = #tpu.dot_dimension_numbers<[1], [0], [0], [1], [0, 0, 1, 1], [], []>} : vector<8x32xf32>, vector<32x32xf32>, vector<8x32xf32> -> vector<8x32xf32>
    %14 = arith.addf %12, %13 : vector<8x32xf32>
    %15 = math.tanh %14 : vector<8x32xf32>
    %16 = vector.extract_strided_slice %7 {offsets = [16, 0], sizes = [8, 32], strides = [1, 1]} : vector<64x32xf32> to vector<8x32xf32>
    %cst_8 = arith.constant dense<0.000000e+00> : vector<8x32xf32>
    %17 = tpu.matmul %15, %1, %cst_8 {dimension_numbers = #tpu.dot_dimension_numbers<[1], [0], [0], [1], [0, 0, 1, 1], [], []>} : vector<8x32xf32>, vector<32x32xf32>, vector<8x32xf32> -> vector<8x32xf32>
    %18 = arith.addf %16, %17 : vector<8x32xf32>
    %19 = math.tanh %18 : vector<8x32xf32>
    %20 = vector.extract_strided_slice %7 {offsets = [24, 0], sizes = [8, 32], strides = [1, 1]} : vector<64x32xf32> to vector<8x32xf32>
    %cst_9 = arith.constant dense<0.000000e+00> : vector<8x32xf32>
    %21 = tpu.matmul %19, %1, %cst_9 {dimension_numbers = #tpu.dot_dimension_numbers<[1], [0], [0], [1], [0, 0, 1, 1], [], []>} : vector<8x32xf32>, vector<32x32xf32>, vector<8x32xf32> -> vector<8x32xf32>
    %22 = arith.addf %20, %21 : vector<8x32xf32>
    %23 = math.tanh %22 : vector<8x32xf32>
    %24 = vector.extract_strided_slice %7 {offsets = [32, 0], sizes = [8, 32], strides = [1, 1]} : vector<64x32xf32> to vector<8x32xf32>
    %cst_10 = arith.constant dense<0.000000e+00> : vector<8x32xf32>
    %25 = tpu.matmul %23, %1, %cst_10 {dimension_numbers = #tpu.dot_dimension_numbers<[1], [0], [0], [1], [0, 0, 1, 1], [], []>} : vector<8x32xf32>, vector<32x32xf32>, vector<8x32xf32> -> vector<8x32xf32>
    %26 = arith.addf %24, %25 : vector<8x32xf32>
    %27 = math.tanh %26 : vector<8x32xf32>
    %28 = vector.extract_strided_slice %7 {offsets = [40, 0], sizes = [8, 32], strides = [1, 1]} : vector<64x32xf32> to vector<8x32xf32>
    %cst_11 = arith.constant dense<0.000000e+00> : vector<8x32xf32>
    %29 = tpu.matmul %27, %1, %cst_11 {dimension_numbers = #tpu.dot_dimension_numbers<[1], [0], [0], [1], [0, 0, 1, 1], [], []>} : vector<8x32xf32>, vector<32x32xf32>, vector<8x32xf32> -> vector<8x32xf32>
    %30 = arith.addf %28, %29 : vector<8x32xf32>
    %31 = math.tanh %30 : vector<8x32xf32>
    %32 = vector.extract_strided_slice %7 {offsets = [48, 0], sizes = [8, 32], strides = [1, 1]} : vector<64x32xf32> to vector<8x32xf32>
    %cst_12 = arith.constant dense<0.000000e+00> : vector<8x32xf32>
    %33 = tpu.matmul %31, %1, %cst_12 {dimension_numbers = #tpu.dot_dimension_numbers<[1], [0], [0], [1], [0, 0, 1, 1], [], []>} : vector<8x32xf32>, vector<32x32xf32>, vector<8x32xf32> -> vector<8x32xf32>
    %34 = arith.addf %32, %33 : vector<8x32xf32>
    %35 = math.tanh %34 : vector<8x32xf32>
    %36 = vector.extract_strided_slice %7 {offsets = [56, 0], sizes = [8, 32], strides = [1, 1]} : vector<64x32xf32> to vector<8x32xf32>
    %cst_13 = arith.constant dense<0.000000e+00> : vector<8x32xf32>
    %37 = tpu.matmul %35, %1, %cst_13 {dimension_numbers = #tpu.dot_dimension_numbers<[1], [0], [0], [1], [0, 0, 1, 1], [], []>} : vector<8x32xf32>, vector<32x32xf32>, vector<8x32xf32> -> vector<8x32xf32>
    %38 = arith.addf %36, %37 : vector<8x32xf32>
    %39 = math.tanh %38 : vector<8x32xf32>
    %c0_14 = arith.constant 0 : index
    %c0_15 = arith.constant 0 : index
    %40 = vector.load %arg2[%c0_14, %c0_15] : memref<40x128xf32, #tpu.memory_space<vmem>>, vector<32x128xf32>
    %c32 = arith.constant 32 : index
    %c0_16 = arith.constant 0 : index
    %41 = vector.load %arg2[%c32, %c0_16] : memref<40x128xf32, #tpu.memory_space<vmem>>, vector<1x128xf32>
    %cst_17 = arith.constant dense<0.000000e+00> : vector<8x128xf32>
    %42 = tpu.matmul %39, %40, %cst_17 {dimension_numbers = #tpu.dot_dimension_numbers<[1], [0], [0], [1], [0, 0, 1, 1], [], []>} : vector<8x32xf32>, vector<32x128xf32>, vector<8x128xf32> -> vector<8x128xf32>
    %43 = vector.broadcast %41 : vector<1x128xf32> to vector<8x128xf32>
    %44 = arith.addf %42, %43 : vector<8x128xf32>
    %cst_18 = arith.constant dense<0xFF800000> : vector<8xf32>
    %45 = vector.multi_reduction <maximumf>, %44, %cst_18 [1] : vector<8x128xf32> to vector<8xf32>
    %46 = vector.shape_cast %45 : vector<8xf32> to vector<8x1xf32>
    %47 = vector.broadcast %46 : vector<8x1xf32> to vector<8x128xf32>
    %48 = arith.subf %44, %47 : vector<8x128xf32>
    %49 = math.exp %48 : vector<8x128xf32>
    %cst_19 = arith.constant dense<0.000000e+00> : vector<8xf32>
    %50 = vector.multi_reduction <add>, %49, %cst_19 [1] : vector<8x128xf32> to vector<8xf32>
    %51 = vector.shape_cast %50 : vector<8xf32> to vector<8x1xf32>
    %52 = math.log %51 : vector<8x1xf32>
    %53 = arith.addf %52, %46 : vector<8x1xf32>
    %54 = vector.broadcast %53 : vector<8x1xf32> to vector<8x128xf32>
    %55 = arith.subf %44, %54 : vector<8x128xf32>
    %c0_20 = arith.constant 0 : index
    %c0_21 = arith.constant 0 : index
    %56 = vector.load %arg3[%c0_20, %c0_21] : memref<8x128xf32, #tpu.memory_space<vmem>>, vector<8x128xf32>
    tpu.vector_store %arg3[%c0_20, %c0_21], %55 {strides = array<i32>} : memref<8x128xf32, #tpu.memory_space<vmem>>, vector<8x128xf32>,
    return
  }
}

</mosaic_0001>

<llo_original>
// kernel: rnn_forward.1
$region0: #{rnn_forward.1}
  #allocation0 [shape = 'u32[]', space=smem, size = 0x4, offset = 0x4, fixed_abs, tag = 'smem constant byte address 0x4 - core index']
  #allocation1 [shape = 'u32[144,128]{1,0:T(1,128)}', space=vmem, size = 0x12000, scoped, tag = 'internal scratch']
  %s0 = inlined_call_operand.vmem [shape: f32[64,16], index: 0, kind: input, shape index: {}]
  %s1 = inlined_call_operand.vmem [shape: f32[64,32], index: 1, kind: input, shape index: {}]
  %s2 = inlined_call_operand.vmem [shape: f32[40,128], index: 2, kind: input, shape index: {}]
  %s3 = inlined_call_operand.vmem [shape: f32[8,128], index: 3, kind: output, shape index: {}]
  %s4 = sld [smem:[#allocation0]]
  $region22: #{rnn_forward.1} parent=0
    _
  %s6 = ssub.s32 1, %s4
  %s7 = scalar_select 0, %s6, %s4
  // Predicated region
  $region2: #{rnn_forward.1} parent=0 // pred_check
    _
  $region3: #{rnn_forward.1} parent=0 // pred_check_branch
    %9 = sbr.rel (0) target = $region5
  $region4: #{rnn_forward.1} parent=0 // pred_region
    _
  $region5: #{rnn_forward.1} parent=0 // pred_fallthru
    _
  // Predicated region
  $region6: #{rnn_forward.1} parent=0 // pred_check
    _
  $region7: #{rnn_forward.1} parent=0 // pred_check_branch
    %11 = sbr.rel (0) target = $region9
  $region8: #{rnn_forward.1} parent=0 // pred_region
    _
  $region9: #{rnn_forward.1} parent=0 // pred_fallthru
    _
  // Predicated region
  $region10: #{rnn_forward.1} parent=0 // pred_check
    _
  $region11: #{rnn_forward.1} parent=0 // pred_check_branch
    %13 = sbr.rel (0) target = $region13
  $region12: #{rnn_forward.1} parent=0 // pred_region
    _
  $region13: #{rnn_forward.1} parent=0 // pred_fallthru
    _
  %v14 = vld [vmem:[%s1] sm:$0xff]
  %v15 = vld [vmem:[%s1 + $0x8] sm:$0xff]
  %v16 = vld [vmem:[%s1 + $0x10] sm:$0xff]
  %v17 = vld [vmem:[%s1 + $0x18] sm:$0xff]
  %v18 = vld [vmem:[%s1 + $0x20] sm:$0xff]
  %v19 = vld [vmem:[%s1 + $0x28] sm:$0xff]
  %v20 = vld [vmem:[%s1 + $0x30] sm:$0xff]
  %v21 = vld [vmem:[%s1 + $0x38] sm:$0x1]
  %v22 = vld [vmem:[%s0] sm:$0xff]
  %v23 = vld [vmem:[%s0 + $0x8] sm:$0xff]
  %v24 = vld [vmem:[%s0 + $0x10] sm:$0xff]
  %v25 = vld [vmem:[%s0 + $0x18] sm:$0xff]
  %v26 = vld [vmem:[%s0 + $0x20] sm:$0xff]
  %v27 = vld [vmem:[%s0 + $0x28] sm:$0xff]
  %v28 = vld [vmem:[%s0 + $0x30] sm:$0xff]
  %v29 = vld [vmem:[%s0 + $0x38] sm:$0xff]
  %v30 = vlaneseq
  %v31 = vshrl.u32 %v30, 7
  %v32 = vsub.s32 0, %v31
  %v33 = vrot.slane %v21, %v32
  %vm34 = vcmask 130048
  %v36 = vsel %vm34, %v22, 0
  %v39 = vsel %vm34, %v23, 0
  %v42 = vsel %vm34, %v24, 0
  %v45 = vsel %vm34, %v25, 0
  %v48 = vsel %vm34, %v26, 0
  %v51 = vsel %vm34, %v27, 0
  %v54 = vsel %vm34, %v28, 0
  %v57 = vsel %vm34, %v29, 0
  %59 = vmatprep.subr.mxu0 0.0
  %60 = vmatpush1.msra.mxu0 0.0
  %61 = vmatprep.subr.mxu0 0.0
  %62 = vmatpush1.msra.mxu0 0.0
  %63 = vmatprep.subr.mxu0 0.0
  %64 = vmatpush1.msra.mxu0 0.0
  %65 = vmatprep.subr.mxu0 0.0
  %66 = vmatpush1.msra.mxu0 0.0
  %67 = vmatprep.subr.mxu0 0.0
  %68 = vmatpush1.msra.mxu0 0.0
  %69 = vmatprep.subr.mxu0 0.0
  %70 = vmatpush1.msra.mxu0 0.0
  %71 = vmatprep.subr.mxu0 0.0
  %72 = vmatpush1.msra.mxu0 0.0
  %73 = vmatprep.subr.mxu0 0.0
  %74 = vmatpush1.msra.mxu0 0.0
  %75 = vmatprep.subr.mxu0 0.0
  %76 = vmatpush1.msra.mxu0 0.0
  %77 = vmatprep.subr.mxu0 0.0
  %78 = vmatpush1.msra.mxu0 0.0
  %79 = vmatprep.subr.mxu0 0.0
  %80 = vmatpush1.msra.mxu0 0.0
  %81 = vmatprep.subr.mxu0 0.0
  %82 = vmatpush1.msra.mxu0 0.0
  %83 = vmatprep.subr.mxu0 0.0
  %84 = vmatpush1.msra.mxu0 0.0
  %85 = vmatprep.subr.mxu0 0.0
  %86 = vmatpush1.msra.mxu0 0.0
  %87 = vmatprep.subr.mxu0 0.0
  %88 = vmatpush1.msra.mxu0 %v15
  %89 = vmatprep.subr.mxu0 0.0
  %90 = vmatpush1.msra.mxu0 %v14
  %91 = vmatprep.subr.mxu0 0.0
  %92 = vmatpush2.msra.mxu0 0.0
  %93 = vmatprep.subr.mxu0 0.0
  %94 = vmatpush2.msra.mxu0 0.0
  %95 = vmatprep.subr.mxu0 0.0
  %96 = vmatpush2.msra.mxu0 0.0
  %97 = vmatprep.subr.mxu0 0.0
  %98 = vmatpush2.msra.mxu0 0.0
  %99 = vmatprep.subr.mxu0 0.0
  %100 = vmatpush2.msra.mxu0 0.0
  %101 = vmatprep.subr.mxu0 0.0
  %102 = vmatpush2.msra.mxu0 0.0
  %103 = vmatprep.subr.mxu0 0.0
  %104 = vmatpush2.msra.mxu0 0.0
  %105 = vmatprep.subr.mxu0 0.0
  %106 = vmatpush2.msra.mxu0 0.0
  %107 = vmatprep.subr.mxu0 0.0
  %108 = vmatpush2.msra.mxu0 0.0
  %109 = vmatprep.subr.mxu0 0.0
  %110 = vmatpush2.msra.mxu0 0.0
  %111 = vmatprep.subr.mxu0 0.0
  %112 = vmatpush2.msra.mxu0 0.0
  %113 = vmatprep.subr.mxu0 0.0
  %114 = vmatpush2.msra.mxu0 0.0
  %115 = vmatprep.subr.mxu0 0.0
  %116 = vmatpush2.msra.mxu0 0.0
  %117 = vmatprep.subr.mxu0 0.0
  %118 = vmatpush2.msra.mxu0 0.0
  %119 = vmatprep.subr.mxu0 0.0
  %120 = vmatpush2.msra.mxu0 0.0
  %121 = vmatprep.subr.mxu0 0.0
  %122 = vmatpush2.msra.mxu0 0.0
  %123 = vmatprep.mubr.f32.mxu0 0.0
  %124 = vmatmul.mubr.f32.gmra.mxu0 %v36
  %v125 = vpop.f32.mrf.mxu0
  %v126 = vadd.f32 %v33, %v125
  %v127 = vpop.f32.mrf.mxu0
  %128 = vmatprep.mubr.f32.mxu0 0.0
  %129 = vmatmul.mubr.f32.gmra.mxu0 %v39
  %v130 = vpop.f32.mrf.mxu0
  %v131 = vadd.f32 %v33, %v130
  %v132 = vpop.f32.mrf.mxu0
  %133 = vmatprep.mubr.f32.mxu0 0.0
  %134 = vmatmul.mubr.f32.gmra.mxu0 %v42
  %v135 = vpop.f32.mrf.mxu0
  %v136 = vadd.f32 %v33, %v135
  %v137 = vpop.f32.mrf.mxu0
  %138 = vmatprep.mubr.f32.mxu0 0.0
  %139 = vmatmul.mubr.f32.gmra.mxu0 %v45
  %v140 = vpop.f32.mrf.mxu0
  %v141 = vadd.f32 %v33, %v140
  %v142 = vpop.f32.mrf.mxu0
  %143 = vmatprep.mubr.f32.mxu0 0.0
  %144 = vmatmul.mubr.f32.gmra.mxu0 %v48
  %v145 = vpop.f32.mrf.mxu0
  %v146 = vadd.f32 %v33, %v145
  %v147 = vpop.f32.mrf.mxu0
  %148 = vmatprep.mubr.f32.mxu0 0.0
  %149 = vmatmul.mubr.f32.gmra.mxu0 %v51
  %v150 = vpop.f32.mrf.mxu0
  %v151 = vadd.f32 %v33, %v150
  %v152 = vpop.f32.mrf.mxu0
  %153 = vmatprep.mubr.f32.mxu0 0.0
  %154 = vmatmul.mubr.f32.gmra.mxu0 %v54
  %v155 = vpop.f32.mrf.mxu0
  %v156 = vadd.f32 %v33, %v155
  %v157 = vpop.f32.mrf.mxu0
  %158 = vmatprep.mubr.f32.mxu0 0.0
  %159 = vmatmul.mubr.f32.gmra.mxu0 %v57
  %v160 = vpop.f32.mrf.mxu0
  %v161 = vadd.f32 %v33, %v160
  %v162 = vpop.f32.mrf.mxu0
  %163 = vdwg.mxu0
  %vm164 = vcmask 261120
  %v166 = vsel %vm164, %v20, 0
  %168 = vmatprep.subr.mxu0 0.0
  %169 = vmatpush1.msra.mxu0 0.0
  %170 = vmatprep.subr.mxu0 0.0
  %171 = vmatpush1.msra.mxu0 0.0
  %172 = vmatprep.subr.mxu0 0.0
  %173 = vmatpush1.msra.mxu0 0.0
  %174 = vmatprep.subr.mxu0 0.0
  %175 = vmatpush1.msra.mxu0 0.0
  %176 = vmatprep.subr.mxu0 0.0
  %177 = vmatpush1.msra.mxu0 0.0
  %178 = vmatprep.subr.mxu0 0.0
  %179 = vmatpush1.msra.mxu0 0.0
  %180 = vmatprep.subr.mxu0 0.0
  %181 = vmatpush1.msra.mxu0 0.0
  %182 = vmatprep.subr.mxu0 0.0
  %183 = vmatpush1.msra.mxu0 0.0
  %184 = vmatprep.subr.mxu0 0.0
  %185 = vmatpush1.msra.mxu0 0.0
  %186 = vmatprep.subr.mxu0 0.0
  %187 = vmatpush1.msra.mxu0 0.0
  %188 = vmatprep.subr.mxu0 0.0
  %189 = vmatpush1.msra.mxu0 0.0
  %190 = vmatprep.subr.mxu0 0.0
  %191 = vmatpush1.msra.mxu0 0.0
  %192 = vmatprep.subr.mxu0 0.0
  %193 = vmatpush1.msra.mxu0 %v19
  %194 = vmatprep.subr.mxu0 0.0
  %195 = vmatpush1.msra.mxu0 %v18
  %196 = vmatprep.subr.mxu0 0.0
  %197 = vmatpush1.msra.mxu0 %v17
  %198 = vmatprep.subr.mxu0 0.0
  %199 = vmatpush1.msra.mxu0 %v16
  %200 = vmatprep.subr.mxu0 0.0
  %201 = vmatpush2.msra.mxu0 0.0
  %202 = vmatprep.subr.mxu0 0.0
  %203 = vmatpush2.msra.mxu0 0.0
  %204 = vmatprep.subr.mxu0 0.0
  %205 = vmatpush2.msra.mxu0 0.0
  %206 = vmatprep.subr.mxu0 0.0
  %207 = vmatpush2.msra.mxu0 0.0
  %208 = vmatprep.subr.mxu0 0.0
  %209 = vmatpush2.msra.mxu0 0.0
  %210 = vmatprep.subr.mxu0 0.0
  %211 = vmatpush2.msra.mxu0 0.0
  %212 = vmatprep.subr.mxu0 0.0
  %213 = vmatpush2.msra.mxu0 0.0
  %214 = vmatprep.subr.mxu0 0.0
  %215 = vmatpush2.msra.mxu0 0.0
  %216 = vmatprep.subr.mxu0 0.0
  %217 = vmatpush2.msra.mxu0 0.0
  %218 = vmatprep.subr.mxu0 0.0
  %219 = vmatpush2.msra.mxu0 0.0
  %220 = vmatprep.subr.mxu0 0.0
  %221 = vmatpush2.msra.mxu0 0.0
  %222 = vmatprep.subr.mxu0 0.0
  %223 = vmatpush2.msra.mxu0 0.0
  %224 = vmatprep.subr.mxu0 0.0
  %225 = vmatpush2.msra.mxu0 0.0
  %226 = vmatprep.subr.mxu0 0.0
  %227 = vmatpush2.msra.mxu0 0.0
  %228 = vmatprep.subr.mxu0 0.0
  %229 = vmatpush2.msra.mxu0 0.0
  %230 = vmatprep.subr.mxu0 0.0
  %231 = vmatpush2.msra.mxu0 0.0
  %232 = vmatprep.mubr.f32.mxu0 0.0
  %233 = vmatmul.mubr.f32.gmra.mxu0 %v166
  %v234 = vpop.f32.mrf.mxu0
  %v235 = vadd.f32 0.0, %v234
  %v236 = vpop.f32.mrf.mxu0
  %237 = vdwg.mxu0
  %v238 = vadd.f32 %v126, %v235
  %v239 = vtanh.pop %v238
  %v241 = vsel %vm164, %v239, 0
  %243 = vmatprep.subr.mxu0 0.0
  %244 = vmatpush1.msra.mxu0 0.0
  %245 = vmatprep.subr.mxu0 0.0
  %246 = vmatpush1.msra.mxu0 0.0
  %247 = vmatprep.subr.mxu0 0.0
  %248 = vmatpush1.msra.mxu0 0.0
  %249 = vmatprep.subr.mxu0 0.0
  %250 = vmatpush1.msra.mxu0 0.0
  %251 = vmatprep.subr.mxu0 0.0
  %252 = vmatpush1.msra.mxu0 0.0
  %253 = vmatprep.subr.mxu0 0.0
  %254 = vmatpush1.msra.mxu0 0.0
  %255 = vmatprep.subr.mxu0 0.0
  %256 = vmatpush1.msra.mxu0 0.0
  %257 = vmatprep.subr.mxu0 0.0
  %258 = vmatpush1.msra.mxu0 0.0
  %259 = vmatprep.subr.mxu0 0.0
  %260 = vmatpush1.msra.mxu0 0.0
  %261 = vmatprep.subr.mxu0 0.0
  %262 = vmatpush1.msra.mxu0 0.0
  %263 = vmatprep.subr.mxu0 0.0
  %264 = vmatpush1.msra.mxu0 0.0
  %265 = vmatprep.subr.mxu0 0.0
  %266 = vmatpush1.msra.mxu0 0.0
  %267 = vmatprep.subr.mxu0 0.0
  %268 = vmatpush1.msra.mxu0 %v19
  %269 = vmatprep.subr.mxu0 0.0
  %270 = vmatpush1.msra.mxu0 %v18
  %271 = vmatprep.subr.mxu0 0.0
  %272 = vmatpush1.msra.mxu0 %v17
  %273 = vmatprep.subr.mxu0 0.0
  %274 = vmatpush1.msra.mxu0 %v16
  %275 = vmatprep.subr.mxu0 0.0
  %276 = vmatpush2.msra.mxu0 0.0
  %277 = vmatprep.subr.mxu0 0.0
  %278 = vmatpush2.msra.mxu0 0.0
  %279 = vmatprep.subr.mxu0 0.0
  %280 = vmatpush2.msra.mxu0 0.0
  %281 = vmatprep.subr.mxu0 0.0
  %282 = vmatpush2.msra.mxu0 0.0
  %283 = vmatprep.subr.mxu0 0.0
  %284 = vmatpush2.msra.mxu0 0.0
  %285 = vmatprep.subr.mxu0 0.0
  %286 = vmatpush2.msra.mxu0 0.0
  %287 = vmatprep.subr.mxu0 0.0
  %288 = vmatpush2.msra.mxu0 0.0
  %289 = vmatprep.subr.mxu0 0.0
  %290 = vmatpush2.msra.mxu0 0.0
  %291 = vmatprep.subr.mxu0 0.0
  %292 = vmatpush2.msra.mxu0 0.0
  %293 = vmatprep.subr.mxu0 0.0
  %294 = vmatpush2.msra.mxu0 0.0
  %295 = vmatprep.subr.mxu0 0.0
  %296 = vmatpush2.msra.mxu0 0.0
  %297 = vmatprep.subr.mxu0 0.0
  %298 = vmatpush2.msra.mxu0 0.0
  %299 = vmatprep.subr.mxu0 0.0
  %300 = vmatpush2.msra.mxu0 0.0
  %301 = vmatprep.subr.mxu0 0.0
  %302 = vmatpush2.msra.mxu0 0.0
  %303 = vmatprep.subr.mxu0 0.0
  %304 = vmatpush2.msra.mxu0 0.0
  %305 = vmatprep.subr.mxu0 0.0
  %306 = vmatpush2.msra.mxu0 0.0
  %307 = vmatprep.mubr.f32.mxu0 0.0
  %308 = vmatmul.mubr.f32.gmra.mxu0 %v241
  %v309 = vpop.f32.mrf.mxu0
  %v310 = vadd.f32 0.0, %v309
  %v311 = vpop.f32.mrf.mxu0
  %312 = vdwg.mxu0
  %v313 = vadd.f32 %v131, %v310
  %v314 = vtanh.pop %v313
  %v316 = vsel %vm164, %v314, 0
  %318 = vmatprep.subr.mxu0 0.0
  %319 = vmatpush1.msra.mxu0 0.0
  %320 = vmatprep.subr.mxu0 0.0
  %321 = vmatpush1.msra.mxu0 0.0
  %322 = vmatprep.subr.mxu0 0.0
  %323 = vmatpush1.msra.mxu0 0.0
  %324 = vmatprep.subr.mxu0 0.0
  %325 = vmatpush1.msra.mxu0 0.0
  %326 = vmatprep.subr.mxu0 0.0
  %327 = vmatpush1.msra.mxu0 0.0
  %328 = vmatprep.subr.mxu0 0.0
  %329 = vmatpush1.msra.mxu0 0.0
  %330 = vmatprep.subr.mxu0 0.0
  %331 = vmatpush1.msra.mxu0 0.0
  %332 = vmatprep.subr.mxu0 0.0
  %333 = vmatpush1.msra.mxu0 0.0
  %334 = vmatprep.subr.mxu0 0.0
  %335 = vmatpush1.msra.mxu0 0.0
  %336 = vmatprep.subr.mxu0 0.0
  %337 = vmatpush1.msra.mxu0 0.0
  %338 = vmatprep.subr.mxu0 0.0
  %339 = vmatpush1.msra.mxu0 0.0
  %340 = vmatprep.subr.mxu0 0.0
  %341 = vmatpush1.msra.mxu0 0.0
  %342 = vmatprep.subr.mxu0 0.0
  %343 = vmatpush1.msra.mxu0 %v19
  %344 = vmatprep.subr.mxu0 0.0
  %345 = vmatpush1.msra.mxu0 %v18
  %346 = vmatprep.subr.mxu0 0.0
  %347 = vmatpush1.msra.mxu0 %v17
  %348 = vmatprep.subr.mxu0 0.0
  %349 = vmatpush1.msra.mxu0 %v16
  %350 = vmatprep.subr.mxu0 0.0
  %351 = vmatpush2.msra.mxu0 0.0
  %352 = vmatprep.subr.mxu0 0.0
  %353 = vmatpush2.msra.mxu0 0.0
  %354 = vmatprep.subr.mxu0 0.0
  %355 = vmatpush2.msra.mxu0 0.0
  %356 = vmatprep.subr.mxu0 0.0
  %357 = vmatpush2.msra.mxu0 0.0
  %358 = vmatprep.subr.mxu0 0.0
  %359 = vmatpush2.msra.mxu0 0.0
  %360 = vmatprep.subr.mxu0 0.0
  %361 = vmatpush2.msra.mxu0 0.0
  %362 = vmatprep.subr.mxu0 0.0
  %363 = vmatpush2.msra.mxu0 0.0
  %364 = vmatprep.subr.mxu0 0.0
  %365 = vmatpush2.msra.mxu0 0.0
  %366 = vmatprep.subr.mxu0 0.0
  %367 = vmatpush2.msra.mxu0 0.0
  %368 = vmatprep.subr.mxu0 0.0
  %369 = vmatpush2.msra.mxu0 0.0
  %370 = vmatprep.subr.mxu0 0.0
  %371 = vmatpush2.msra.mxu0 0.0
  %372 = vmatprep.subr.mxu0 0.0
  %373 = vmatpush2.msra.mxu0 0.0
  %374 = vmatprep.subr.mxu0 0.0
  %375 = vmatpush2.msra.mxu0 0.0
  %376 = vmatprep.subr.mxu0 0.0
  %377 = vmatpush2.msra.mxu0 0.0
  %378 = vmatprep.subr.mxu0 0.0
  %379 = vmatpush2.msra.mxu0 0.0
  %380 = vmatprep.subr.mxu0 0.0
  %381 = vmatpush2.msra.mxu0 0.0
  %382 = vmatprep.mubr.f32.mxu0 0.0
  %383 = vmatmul.mubr.f32.gmra.mxu0 %v316
  %v384 = vpop.f32.mrf.mxu0
  %v385 = vadd.f32 0.0, %v384
  %v386 = vpop.f32.mrf.mxu0
  %387 = vdwg.mxu0
  %v388 = vadd.f32 %v136, %v385
  %v389 = vtanh.pop %v388
  %v391 = vsel %vm164, %v389, 0
  %393 = vmatprep.subr.mxu0 0.0
  %394 = vmatpush1.msra.mxu0 0.0
  %395 = vmatprep.subr.mxu0 0.0
  %396 = vmatpush1.msra.mxu0 0.0
  %397 = vmatprep.subr.mxu0 0.0
  %398 = vmatpush1.msra.mxu0 0.0
  %399 = vmatprep.subr.mxu0 0.0
  %400 = vmatpush1.msra.mxu0 0.0
  %401 = vmatprep.subr.mxu0 0.0
  %402 = vmatpush1.msra.mxu0 0.0
  %403 = vmatprep.subr.mxu0 0.0
  %404 = vmatpush1.msra.mxu0 0.0
  %405 = vmatprep.subr.mxu0 0.0
  %406 = vmatpush1.msra.mxu0 0.0
  %407 = vmatprep.subr.mxu0 0.0
  %408 = vmatpush1.msra.mxu0 0.0
  %409 = vmatprep.subr.mxu0 0.0
  %410 = vmatpush1.msra.mxu0 0.0
  %411 = vmatprep.subr.mxu0 0.0
  %412 = vmatpush1.msra.mxu0 0.0
  %413 = vmatprep.subr.mxu0 0.0
  %414 = vmatpush1.msra.mxu0 0.0
  %415 = vmatprep.subr.mxu0 0.0
  %416 = vmatpush1.msra.mxu0 0.0
  %417 = vmatprep.subr.mxu0 0.0
  %418 = vmatpush1.msra.mxu0 %v19
  %419 = vmatprep.subr.mxu0 0.0
  %420 = vmatpush1.msra.mxu0 %v18
  %421 = vmatprep.subr.mxu0 0.0
  %422 = vmatpush1.msra.mxu0 %v17
  %423 = vmatprep.subr.mxu0 0.0
  %424 = vmatpush1.msra.mxu0 %v16
  %425 = vmatprep.subr.mxu0 0.0
  %426 = vmatpush2.msra.mxu0 0.0
  %427 = vmatprep.subr.mxu0 0.0
  %428 = vmatpush2.msra.mxu0 0.0
  %429 = vmatprep.subr.mxu0 0.0
  %430 = vmatpush2.msra.mxu0 0.0
  %431 = vmatprep.subr.mxu0 0.0
  %432 = vmatpush2.msra.mxu0 0.0
  %433 = vmatprep.subr.mxu0 0.0
  %434 = vmatpush2.msra.mxu0 0.0
  %435 = vmatprep.subr.mxu0 0.0
  %436 = vmatpush2.msra.mxu0 0.0
  %437 = vmatprep.subr.mxu0 0.0
  %438 = vmatpush2.msra.mxu0 0.0
  %439 = vmatprep.subr.mxu0 0.0
  %440 = vmatpush2.msra.mxu0 0.0
  %441 = vmatprep.subr.mxu0 0.0
  %442 = vmatpush2.msra.mxu0 0.0
  %443 = vmatprep.subr.mxu0 0.0
  %444 = vmatpush2.msra.mxu0 0.0
  %445 = vmatprep.subr.mxu0 0.0
  %446 = vmatpush2.msra.mxu0 0.0
  %447 = vmatprep.subr.mxu0 0.0
  %448 = vmatpush2.msra.mxu0 0.0
  %449 = vmatprep.subr.mxu0 0.0
  %450 = vmatpush2.msra.mxu0 0.0
  %451 = vmatprep.subr.mxu0 0.0
  %452 = vmatpush2.msra.mxu0 0.0
  %453 = vmatprep.subr.mxu0 0.0
  %454 = vmatpush2.msra.mxu0 0.0
  %455 = vmatprep.subr.mxu0 0.0
  %456 = vmatpush2.msra.mxu0 0.0
  %457 = vmatprep.mubr.f32.mxu0 0.0
  %458 = vmatmul.mubr.f32.gmra.mxu0 %v391
  %v459 = vpop.f32.mrf.mxu0
  %v460 = vadd.f32 0.0, %v459
  %v461 = vpop.f32.mrf.mxu0
  %462 = vdwg.mxu0
  %v463 = vadd.f32 %v141, %v460
  %v464 = vtanh.pop %v463
  %v466 = vsel %vm164, %v464, 0
  %468 = vmatprep.subr.mxu0 0.0
  %469 = vmatpush1.msra.mxu0 0.0
  %470 = vmatprep.subr.mxu0 0.0
  %471 = vmatpush1.msra.mxu0 0.0
  %472 = vmatprep.subr.mxu0 0.0
  %473 = vmatpush1.msra.mxu0 0.0
  %474 = vmatprep.subr.mxu0 0.0
  %475 = vmatpush1.msra.mxu0 0.0
  %476 = vmatprep.subr.mxu0 0.0
  %477 = vmatpush1.msra.mxu0 0.0
  %478 = vmatprep.subr.mxu0 0.0
  %479 = vmatpush1.msra.mxu0 0.0
  %480 = vmatprep.subr.mxu0 0.0
  %481 = vmatpush1.msra.mxu0 0.0
  %482 = vmatprep.subr.mxu0 0.0
  %483 = vmatpush1.msra.mxu0 0.0
  %484 = vmatprep.subr.mxu0 0.0
  %485 = vmatpush1.msra.mxu0 0.0
  %486 = vmatprep.subr.mxu0 0.0
  %487 = vmatpush1.msra.mxu0 0.0
  %488 = vmatprep.subr.mxu0 0.0
  %489 = vmatpush1.msra.mxu0 0.0
  %490 = vmatprep.subr.mxu0 0.0
  %491 = vmatpush1.msra.mxu0 0.0
  %492 = vmatprep.subr.mxu0 0.0
  %493 = vmatpush1.msra.mxu0 %v19
  %494 = vmatprep.subr.mxu0 0.0
  %495 = vmatpush1.msra.mxu0 %v18
  %496 = vmatprep.subr.mxu0 0.0
  %497 = vmatpush1.msra.mxu0 %v17
  %498 = vmatprep.subr.mxu0 0.0
  %499 = vmatpush1.msra.mxu0 %v16
  %500 = vmatprep.subr.mxu0 0.0
  %501 = vmatpush2.msra.mxu0 0.0
  %502 = vmatprep.subr.mxu0 0.0
  %503 = vmatpush2.msra.mxu0 0.0
  %504 = vmatprep.subr.mxu0 0.0
  %505 = vmatpush2.msra.mxu0 0.0
  %506 = vmatprep.subr.mxu0 0.0
  %507 = vmatpush2.msra.mxu0 0.0
  %508 = vmatprep.subr.mxu0 0.0
  %509 = vmatpush2.msra.mxu0 0.0
  %510 = vmatprep.subr.mxu0 0.0
  %511 = vmatpush2.msra.mxu0 0.0
  %512 = vmatprep.subr.mxu0 0.0
  %513 = vmatpush2.msra.mxu0 0.0
  %514 = vmatprep.subr.mxu0 0.0
  %515 = vmatpush2.msra.mxu0 0.0
  %516 = vmatprep.subr.mxu0 0.0
  %517 = vmatpush2.msra.mxu0 0.0
  %518 = vmatprep.subr.mxu0 0.0
  %519 = vmatpush2.msra.mxu0 0.0
  %520 = vmatprep.subr.mxu0 0.0
  %521 = vmatpush2.msra.mxu0 0.0
  %522 = vmatprep.subr.mxu0 0.0
  %523 = vmatpush2.msra.mxu0 0.0
  %524 = vmatprep.subr.mxu0 0.0
  %525 = vmatpush2.msra.mxu0 0.0
  %526 = vmatprep.subr.mxu0 0.0
  %527 = vmatpush2.msra.mxu0 0.0
  %528 = vmatprep.subr.mxu0 0.0
  %529 = vmatpush2.msra.mxu0 0.0
  %530 = vmatprep.subr.mxu0 0.0
  %531 = vmatpush2.msra.mxu0 0.0
  %532 = vmatprep.mubr.f32.mxu0 0.0
  %533 = vmatmul.mubr.f32.gmra.mxu0 %v466
  %v534 = vpop.f32.mrf.mxu0
  %v535 = vadd.f32 0.0, %v534
  %v536 = vpop.f32.mrf.mxu0
  %537 = vdwg.mxu0
  %v538 = vadd.f32 %v146, %v535
  %v539 = vtanh.pop %v538
  %v541 = vsel %vm164, %v539, 0
  %543 = vmatprep.subr.mxu0 0.0
  %544 = vmatpush1.msra.mxu0 0.0
  %545 = vmatprep.subr.mxu0 0.0
  %546 = vmatpush1.msra.mxu0 0.0
  %547 = vmatprep.subr.mxu0 0.0
  %548 = vmatpush1.msra.mxu0 0.0
  %549 = vmatprep.subr.mxu0 0.0
  %550 = vmatpush1.msra.mxu0 0.0
  %551 = vmatprep.subr.mxu0 0.0
  %552 = vmatpush1.msra.mxu0 0.0
  %553 = vmatprep.subr.mxu0 0.0
  %554 = vmatpush1.msra.mxu0 0.0
  %555 = vmatprep.subr.mxu0 0.0
  %556 = vmatpush1.msra.mxu0 0.0
  %557 = vmatprep.subr.mxu0 0.0
  %558 = vmatpush1.msra.mxu0 0.0
  %559 = vmatprep.subr.mxu0 0.0
  %560 = vmatpush1.msra.mxu0 0.0
  %561 = vmatprep.subr.mxu0 0.0
  %562 = vmatpush1.msra.mxu0 0.0
  %563 = vmatprep.subr.mxu0 0.0
  %564 = vmatpush1.msra.mxu0 0.0
  %565 = vmatprep.subr.mxu0 0.0
  %566 = vmatpush1.msra.mxu0 0.0
  %567 = vmatprep.subr.mxu0 0.0
  %568 = vmatpush1.msra.mxu0 %v19
  %569 = vmatprep.subr.mxu0 0.0
  %570 = vmatpush1.msra.mxu0 %v18
  %571 = vmatprep.subr.mxu0 0.0
  %572 = vmatpush1.msra.mxu0 %v17
  %573 = vmatprep.subr.mxu0 0.0
  %574 = vmatpush1.msra.mxu0 %v16
  %575 = vmatprep.subr.mxu0 0.0
  %576 = vmatpush2.msra.mxu0 0.0
  %577 = vmatprep.subr.mxu0 0.0
  %578 = vmatpush2.msra.mxu0 0.0
  %579 = vmatprep.subr.mxu0 0.0
  %580 = vmatpush2.msra.mxu0 0.0
  %581 = vmatprep.subr.mxu0 0.0
  %582 = vmatpush2.msra.mxu0 0.0
  %583 = vmatprep.subr.mxu0 0.0
  %584 = vmatpush2.msra.mxu0 0.0
  %585 = vmatprep.subr.mxu0 0.0
  %586 = vmatpush2.msra.mxu0 0.0
  %587 = vmatprep.subr.mxu0 0.0
  %588 = vmatpush2.msra.mxu0 0.0
  %589 = vmatprep.subr.mxu0 0.0
  %590 = vmatpush2.msra.mxu0 0.0
  %591 = vmatprep.subr.mxu0 0.0
  %592 = vmatpush2.msra.mxu0 0.0
  %593 = vmatprep.subr.mxu0 0.0
  %594 = vmatpush2.msra.mxu0 0.0
  %595 = vmatprep.subr.mxu0 0.0
  %596 = vmatpush2.msra.mxu0 0.0
  %597 = vmatprep.subr.mxu0 0.0
  %598 = vmatpush2.msra.mxu0 0.0
  %599 = vmatprep.subr.mxu0 0.0
  %600 = vmatpush2.msra.mxu0 0.0
  %601 = vmatprep.subr.mxu0 0.0
  %602 = vmatpush2.msra.mxu0 0.0
  %603 = vmatprep.subr.mxu0 0.0
  %604 = vmatpush2.msra.mxu0 0.0
  %605 = vmatprep.subr.mxu0 0.0
  %606 = vmatpush2.msra.mxu0 0.0
  %607 = vmatprep.mubr.f32.mxu0 0.0
  %608 = vmatmul.mubr.f32.gmra.mxu0 %v541
  %v609 = vpop.f32.mrf.mxu0
  %v610 = vadd.f32 0.0, %v609
  %v611 = vpop.f32.mrf.mxu0
  %612 = vdwg.mxu0
  %v613 = vadd.f32 %v151, %v610
  %v614 = vtanh.pop %v613
  %v616 = vsel %vm164, %v614, 0
  %618 = vmatprep.subr.mxu0 0.0
  %619 = vmatpush1.msra.mxu0 0.0
  %620 = vmatprep.subr.mxu0 0.0
  %621 = vmatpush1.msra.mxu0 0.0
  %622 = vmatprep.subr.mxu0 0.0
  %623 = vmatpush1.msra.mxu0 0.0
  %624 = vmatprep.subr.mxu0 0.0
  %625 = vmatpush1.msra.mxu0 0.0
  %626 = vmatprep.subr.mxu0 0.0
  %627 = vmatpush1.msra.mxu0 0.0
  %628 = vmatprep.subr.mxu0 0.0
  %629 = vmatpush1.msra.mxu0 0.0
  %630 = vmatprep.subr.mxu0 0.0
  %631 = vmatpush1.msra.mxu0 0.0
  %632 = vmatprep.subr.mxu0 0.0
  %633 = vmatpush1.msra.mxu0 0.0
  %634 = vmatprep.subr.mxu0 0.0
  %635 = vmatpush1.msra.mxu0 0.0
  %636 = vmatprep.subr.mxu0 0.0
  %637 = vmatpush1.msra.mxu0 0.0
  %638 = vmatprep.subr.mxu0 0.0
  %639 = vmatpush1.msra.mxu0 0.0
  %640 = vmatprep.subr.mxu0 0.0
  %641 = vmatpush1.msra.mxu0 0.0
  %642 = vmatprep.subr.mxu0 0.0
  %643 = vmatpush1.msra.mxu0 %v19
  %644 = vmatprep.subr.mxu0 0.0
  %645 = vmatpush1.msra.mxu0 %v18
  %646 = vmatprep.subr.mxu0 0.0
  %647 = vmatpush1.msra.mxu0 %v17
  %648 = vmatprep.subr.mxu0 0.0
  %649 = vmatpush1.msra.mxu0 %v16
  %650 = vmatprep.subr.mxu0 0.0
  %651 = vmatpush2.msra.mxu0 0.0
  %652 = vmatprep.subr.mxu0 0.0
  %653 = vmatpush2.msra.mxu0 0.0
  %654 = vmatprep.subr.mxu0 0.0
  %655 = vmatpush2.msra.mxu0 0.0
  %656 = vmatprep.subr.mxu0 0.0
  %657 = vmatpush2.msra.mxu0 0.0
  %658 = vmatprep.subr.mxu0 0.0
  %659 = vmatpush2.msra.mxu0 0.0
  %660 = vmatprep.subr.mxu0 0.0
  %661 = vmatpush2.msra.mxu0 0.0
  %662 = vmatprep.subr.mxu0 0.0
  %663 = vmatpush2.msra.mxu0 0.0
  %664 = vmatprep.subr.mxu0 0.0
  %665 = vmatpush2.msra.mxu0 0.0
  %666 = vmatprep.subr.mxu0 0.0
  %667 = vmatpush2.msra.mxu0 0.0
  %668 = vmatprep.subr.mxu0 0.0
  %669 = vmatpush2.msra.mxu0 0.0
  %670 = vmatprep.subr.mxu0 0.0
  %671 = vmatpush2.msra.mxu0 0.0
  %672 = vmatprep.subr.mxu0 0.0
  %673 = vmatpush2.msra.mxu0 0.0
  %674 = vmatprep.subr.mxu0 0.0
  %675 = vmatpush2.msra.mxu0 0.0
  %676 = vmatprep.subr.mxu0 0.0
  %677 = vmatpush2.msra.mxu0 0.0
  %678 = vmatprep.subr.mxu0 0.0
  %679 = vmatpush2.msra.mxu0 0.0
  %680 = vmatprep.subr.mxu0 0.0
  %681 = vmatpush2.msra.mxu0 0.0
  %682 = vmatprep.mubr.f32.mxu0 0.0
  %683 = vmatmul.mubr.f32.gmra.mxu0 %v616
  %v684 = vpop.f32.mrf.mxu0
  %v685 = vadd.f32 0.0, %v684
  %v686 = vpop.f32.mrf.mxu0
  %687 = vdwg.mxu0
  %v688 = vadd.f32 %v156, %v685
  %v689 = vtanh.pop %v688
  %v691 = vsel %vm164, %v689, 0
  %693 = vmatprep.subr.mxu0 0.0
  %694 = vmatpush1.msra.mxu0 0.0
  %695 = vmatprep.subr.mxu0 0.0
  %696 = vmatpush1.msra.mxu0 0.0
  %697 = vmatprep.subr.mxu0 0.0
  %698 = vmatpush1.msra.mxu0 0.0
  %699 = vmatprep.subr.mxu0 0.0
  %700 = vmatpush1.msra.mxu0 0.0
  %701 = vmatprep.subr.mxu0 0.0
  %702 = vmatpush1.msra.mxu0 0.0
  %703 = vmatprep.subr.mxu0 0.0
  %704 = vmatpush1.msra.mxu0 0.0
  %705 = vmatprep.subr.mxu0 0.0
  %706 = vmatpush1.msra.mxu0 0.0
  %707 = vmatprep.subr.mxu0 0.0
  %708 = vmatpush1.msra.mxu0 0.0
  %709 = vmatprep.subr.mxu0 0.0
  %710 = vmatpush1.msra.mxu0 0.0
  %711 = vmatprep.subr.mxu0 0.0
  %712 = vmatpush1.msra.mxu0 0.0
  %713 = vmatprep.subr.mxu0 0.0
  %714 = vmatpush1.msra.mxu0 0.0
  %715 = vmatprep.subr.mxu0 0.0
  %716 = vmatpush1.msra.mxu0 0.0
  %717 = vmatprep.subr.mxu0 0.0
  %718 = vmatpush1.msra.mxu0 %v19
  %719 = vmatprep.subr.mxu0 0.0
  %720 = vmatpush1.msra.mxu0 %v18
  %721 = vmatprep.subr.mxu0 0.0
  %722 = vmatpush1.msra.mxu0 %v17
  %723 = vmatprep.subr.mxu0 0.0
  %724 = vmatpush1.msra.mxu0 %v16
  %725 = vmatprep.subr.mxu0 0.0
  %726 = vmatpush2.msra.mxu0 0.0
  %727 = vmatprep.subr.mxu0 0.0
  %728 = vmatpush2.msra.mxu0 0.0
  %729 = vmatprep.subr.mxu0 0.0
  %730 = vmatpush2.msra.mxu0 0.0
  %731 = vmatprep.subr.mxu0 0.0
  %732 = vmatpush2.msra.mxu0 0.0
  %733 = vmatprep.subr.mxu0 0.0
  %734 = vmatpush2.msra.mxu0 0.0
  %735 = vmatprep.subr.mxu0 0.0
  %736 = vmatpush2.msra.mxu0 0.0
  %737 = vmatprep.subr.mxu0 0.0
  %738 = vmatpush2.msra.mxu0 0.0
  %739 = vmatprep.subr.mxu0 0.0
  %740 = vmatpush2.msra.mxu0 0.0
  %741 = vmatprep.subr.mxu0 0.0
  %742 = vmatpush2.msra.mxu0 0.0
  %743 = vmatprep.subr.mxu0 0.0
  %744 = vmatpush2.msra.mxu0 0.0
  %745 = vmatprep.subr.mxu0 0.0
  %746 = vmatpush2.msra.mxu0 0.0
  %747 = vmatprep.subr.mxu0 0.0
  %748 = vmatpush2.msra.mxu0 0.0
  %749 = vmatprep.subr.mxu0 0.0
  %750 = vmatpush2.msra.mxu0 0.0
  %751 = vmatprep.subr.mxu0 0.0
  %752 = vmatpush2.msra.mxu0 0.0
  %753 = vmatprep.subr.mxu0 0.0
  %754 = vmatpush2.msra.mxu0 0.0
  %755 = vmatprep.subr.mxu0 0.0
  %756 = vmatpush2.msra.mxu0 0.0
  %757 = vmatprep.mubr.f32.mxu0 0.0
  %758 = vmatmul.mubr.f32.gmra.mxu0 %v691
  %v759 = vpop.f32.mrf.mxu0
  %v760 = vadd.f32 0.0, %v759
  %v761 = vpop.f32.mrf.mxu0
  %762 = vdwg.mxu0
  %v763 = vadd.f32 %v161, %v760
  %v764 = vtanh.pop %v763
  %v765 = vld [vmem:[%s2] sm:$0xff]
  %v766 = vld [vmem:[%s2 + $0x8] sm:$0xff]
  %v767 = vld [vmem:[%s2 + $0x10] sm:$0xff]
  %v768 = vld [vmem:[%s2 + $0x18] sm:$0xff]
  %v769 = vld [vmem:[%s2 + $0x20] sm:$0x1]
  %v770 = vlaneseq
  %v771 = vshrl.u32 %v770, 7
  %v772 = vsub.s32 0, %v771
  %v773 = vrot.slane %v769, %v772
  %v775 = vsel %vm164, %v764, 0
  %777 = vmatprep.subr.mxu0 0.0
  %778 = vmatpush1.msra.mxu0 0.0
  %779 = vmatprep.subr.mxu0 0.0
  %780 = vmatpush1.msra.mxu0 0.0
  %781 = vmatprep.subr.mxu0 0.0
  %782 = vmatpush1.msra.mxu0 0.0
  %783 = vmatprep.subr.mxu0 0.0
  %784 = vmatpush1.msra.mxu0 0.0
  %785 = vmatprep.subr.mxu0 0.0
  %786 = vmatpush1.msra.mxu0 0.0
  %787 = vmatprep.subr.mxu0 0.0
  %788 = vmatpush1.msra.mxu0 0.0
  %789 = vmatprep.subr.mxu0 0.0
  %790 = vmatpush1.msra.mxu0 0.0
  %791 = vmatprep.subr.mxu0 0.0
  %792 = vmatpush1.msra.mxu0 0.0
  %793 = vmatprep.subr.mxu0 0.0
  %794 = vmatpush1.msra.mxu0 0.0
  %795 = vmatprep.subr.mxu0 0.0
  %796 = vmatpush1.msra.mxu0 0.0
  %797 = vmatprep.subr.mxu0 0.0
  %798 = vmatpush1.msra.mxu0 0.0
  %799 = vmatprep.subr.mxu0 0.0
  %800 = vmatpush1.msra.mxu0 0.0
  %801 = vmatprep.subr.mxu0 0.0
  %802 = vmatpush1.msra.mxu0 %v768
  %803 = vmatprep.subr.mxu0 0.0
  %804 = vmatpush1.msra.mxu0 %v767
  %805 = vmatprep.subr.mxu0 0.0
  %806 = vmatpush1.msra.mxu0 %v766
  %807 = vmatprep.subr.mxu0 0.0
  %808 = vmatpush1.msra.mxu0 %v765
  %809 = vmatprep.subr.mxu0 0.0
  %810 = vmatpush2.msra.mxu0 0.0
  %811 = vmatprep.subr.mxu0 0.0
  %812 = vmatpush2.msra.mxu0 0.0
  %813 = vmatprep.subr.mxu0 0.0
  %814 = vmatpush2.msra.mxu0 0.0
  %815 = vmatprep.subr.mxu0 0.0
  %816 = vmatpush2.msra.mxu0 0.0
  %817 = vmatprep.subr.mxu0 0.0
  %818 = vmatpush2.msra.mxu0 0.0
  %819 = vmatprep.subr.mxu0 0.0
  %820 = vmatpush2.msra.mxu0 0.0
  %821 = vmatprep.subr.mxu0 0.0
  %822 = vmatpush2.msra.mxu0 0.0
  %823 = vmatprep.subr.mxu0 0.0
  %824 = vmatpush2.msra.mxu0 0.0
  %825 = vmatprep.subr.mxu0 0.0
  %826 = vmatpush2.msra.mxu0 0.0
  %827 = vmatprep.subr.mxu0 0.0
  %828 = vmatpush2.msra.mxu0 0.0
  %829 = vmatprep.subr.mxu0 0.0
  %830 = vmatpush2.msra.mxu0 0.0
  %831 = vmatprep.subr.mxu0 0.0
  %832 = vmatpush2.msra.mxu0 0.0
  %833 = vmatprep.subr.mxu0 0.0
  %834 = vmatpush2.msra.mxu0 0.0
  %835 = vmatprep.subr.mxu0 0.0
  %836 = vmatpush2.msra.mxu0 0.0
  %837 = vmatprep.subr.mxu0 0.0
  %838 = vmatpush2.msra.mxu0 0.0
  %839 = vmatprep.subr.mxu0 0.0
  %840 = vmatpush2.msra.mxu0 0.0
  %841 = vmatprep.mubr.f32.mxu0 0.0
  %842 = vmatmul.mubr.f32.gmra.mxu0 %v775
  %v843 = vpop.f32.mrf.mxu0
  %v844 = vadd.f32 %v773, %v843
  %v845 = vpop.f32.mrf.mxu0
  %846 = vdwg.mxu0
  %847 = vmax.xlane.f32.xlu0 %v844
  %v848 = vpop.xlane.xlu0 %847
  %v849 = vsub.f32 %v844, %v848
  %v850 = vmul.f32 %v849, 1.442695
  %v851 = vpow.pop %v850
  %852 = vadd.xlane.f32.xlu0 %v851
  %v853 = vpop.xlane.xlu0 %852
  %v854 = vlog2.pop %v853
  %v855 = vmul.f32 %v854, 0.6931472
  %v856 = vadd.f32 %v855, %v848
  %v857 = vsub.f32 %v844, %v856
  %858 = vst [vmem:[%s3] sm:$0xff] %v857
  // Predicated region
  $region14: #{rnn_forward.1} parent=0 // pred_check
    _
  $region15: #{rnn_forward.1} parent=0 // pred_check_branch
    %860 = sbr.rel (0) target = $region17
  $region16: #{rnn_forward.1} parent=0 // pred_region
    _
  $region17: #{rnn_forward.1} parent=0 // pred_fallthru
    _
  // Predicated region
  $region18: #{rnn_forward.1} parent=0 // pred_check
    _
  $region19: #{rnn_forward.1} parent=0 // pred_check_branch
    %862 = sbr.rel (0) target = $region21
  $region20: #{rnn_forward.1} parent=0 // pred_region
    _
  $region21: #{rnn_forward.1} parent=0 // pred_fallthru
    _

</llo_original>
